<compile_context>
chip_gen: v6e
topology: v6e:2x2x1
jax: 0.10.0
libtpu: 0.0.40
codegen_flags: <defaults>
</compile_context>

<pallas_src>
import math

import jax
import jax.numpy as jnp
from jax.experimental import pallas as pl
from jax.experimental.pallas import tpu as pltpu


# ----------------------------------------------------------------------------
# Pallas kernel: the einsum('ij,zj->zi', k, x) hot path (a thin GEMM).
# ----------------------------------------------------------------------------
def _self_interaction_kernel(kT_ref, x_ref, o_ref):
    # kT_ref: [n_in_b, n_out_b] (tiny, resident: same block every grid step)
    # x_ref:  [TZ, n_in_b]      (streamed, lane-dense batch tile)
    # o_ref:  [TZ, n_out_b]
    o_ref[...] = jnp.dot(
        x_ref[...], kT_ref[...], preferred_element_type=jnp.float32
    ).astype(o_ref.dtype)


def _choose_fold(n_in, n_out, itemsize, max_k_bytes=8 << 20):
    """Pick G so the folded kernel matrix stays small but lanes are dense."""
    g_out = 128 // math.gcd(n_out, 128)            # makes G*n_out % 128 == 0
    g_in = 128 // math.gcd(n_in, 128)              # makes G*n_in  % 128 == 0
    g_both = g_out * g_in // math.gcd(g_out, g_in)  # lcm: both lane-dense
    for g in (g_both, g_out):
        if (g * n_in) * (g * n_out) * itemsize <= max_k_bytes:
            return g
    return 1


def _num_tensorcores():
    """Best-effort TensorCore count of the local device (v7x has 2)."""
    try:
        dev = jax.devices()[0]
        n = getattr(dev, "num_cores", None)
        if isinstance(n, int) and n >= 1:
            return n
        kind = str(getattr(dev, "device_kind", "")).lower()
        if "v7" in kind:
            return 2
    except Exception:
        pass
    return 1


def self_interaction_pallas(features, k, *, tz_rows=65536):
    """Apply the SelfInteraction linear map with a Pallas TPU kernel.

    features: [..., n_in]
    k:        [n_out, n_in]
    tz_rows:  requested un-folded batch rows per grid step (tunable).
    returns:  [..., n_out]
    """
    *size, n_in = features.shape
    n_out = k.shape[0]
    dtype = features.dtype
    itemsize = jnp.dtype(dtype).itemsize
    sublane = {4: 8, 2: 16, 1: 32}.get(itemsize, 8)

    x = features.reshape(-1, n_in)  # metadata-only
    z = x.shape[0]

    # One-time tiny prep: transpose, cast to the streamed dtype, and fold.
    kT = k.T.astype(dtype)                                   # [n_in, n_out]
    G = _choose_fold(n_in, n_out, itemsize)
    if G > 1:
        kT_blk = jnp.kron(jnp.eye(G, dtype=dtype), kT)       # block-diagonal
    else:
        kT_blk = kT
    n_in_b, n_out_b = G * n_in, G * n_out

    # Pad Z to a multiple of G (channel groups must not straddle folded rows).
    z_pad = pl.cdiv(z, G) * G
    if z_pad != z:
        x = jnp.pad(x, ((0, z_pad - z), (0, 0)))
    xf = x.reshape(z_pad // G, n_in_b)  # row-major fold: metadata-only
    zf = z_pad // G

    # --- tile selection (folded rows per grid step) --------------------------
    stream_budget = 22 << 20  # bytes for double-buffered x + out tiles
    row_bytes = (n_in_b + n_out_b) * itemsize
    tz_fold_req = max(1, tz_rows // G)
    tz_fold_cap = max(sublane, (stream_budget // (2 * row_bytes)) // sublane * sublane)
    tz_fold = min(tz_fold_req, tz_fold_cap)
    tz_fold = max(sublane, (tz_fold // sublane) * sublane)

    # Multi-TensorCore chips (v7x): keep >= 2 steps per core so the "parallel"
    # grid axis shards and each core still pipelines.  Single-TC chips
    # (v5e/v6e): extra steps are a serial loop, so don't force a split.
    num_tc = _num_tensorcores()
    if num_tc >= 2 and zf >= 2 * num_tc * sublane:
        per_step = pl.cdiv(pl.cdiv(zf, 2 * num_tc), sublane) * sublane
        tz_fold = min(tz_fold, per_step)

    if tz_fold >= zf:
        tz_fold = zf  # single step; full-extent block is always layout-legal

    grid = (pl.cdiv(zf, tz_fold),)  # ragged tail masked by Pallas

    cost = pl.CostEstimate(
        flops=2 * zf * n_in_b * n_out_b,
        transcendentals=0,
        bytes_accessed=zf * (n_in_b + n_out_b) * itemsize
        + kT_blk.size * itemsize,
    )

    out_f = pl.pallas_call(
        _self_interaction_kernel,
        out_shape=jax.ShapeDtypeStruct((zf, n_out_b), dtype),
        grid=grid,
        in_specs=[
            # kT_blk: full (small) array, same block every step -> resident.
            pl.BlockSpec((n_in_b, n_out_b), lambda i: (0, 0)),
            # x: stream the folded batch axis in big lane-dense tiles.
            pl.BlockSpec((tz_fold, n_in_b), lambda i: (i, 0)),
        ],
        out_specs=pl.BlockSpec((tz_fold, n_out_b), lambda i: (i, 0)),
        compiler_params=pltpu.CompilerParams(
            dimension_semantics=("parallel",),
            vmem_limit_bytes=32 * 1024 * 1024,
        ),
        cost_estimate=cost,
    )(kT_blk, xf)

    out = out_f.reshape(z_pad, n_out)
    if z_pad != z:
        out = out[:z]
    return out.reshape(*size, n_out)


# ----------------------------------------------------------------------------
# Parameter setup (plain-JAX glue): build the kernel matrix k = Kernel(r=0).
# At r=0 only scalar (l_filter=0) paths contribute, which requires
# l_in == l_out; the resulting matrix mixes multiplicities within each l and
# is identity over the (2l+1) m-components.
# ----------------------------------------------------------------------------
def rs_dim(Rs):
    return sum(mul * (2 * l + 1) for mul, l in Rs)


def build_self_interaction_matrix(key, Rs_in, Rs_out, dtype=jnp.float32):
    n_in = rs_dim(Rs_in)
    n_out = rs_dim(Rs_out)
    k = jnp.zeros((n_out, n_in), dtype=dtype)

    out_off = 0
    for mul_out, l_out in Rs_out:
        dim_out_block = mul_out * (2 * l_out + 1)
        in_off = 0
        for mul_in, l_in in Rs_in:
            dim_in_block = mul_in * (2 * l_in + 1)
            if l_in == l_out:
                key, sub = jax.random.split(key)
                w = jax.random.normal(sub, (mul_out, mul_in), dtype=dtype)
                w = w / jnp.sqrt(jnp.asarray(mul_in, dtype=dtype))
                eye_m = jnp.eye(2 * l_out + 1, dtype=dtype)
                block = jnp.kron(w, eye_m)
                k = k.at[
                    out_off : out_off + dim_out_block,
                    in_off : in_off + dim_in_block,
                ].set(block)
            in_off += dim_in_block
        out_off += dim_out_block
    return k


# ----------------------------------------------------------------------------
# Demo / self-check
# ----------------------------------------------------------------------------
if __name__ == "__main__":
    key = jax.random.PRNGKey(0)

    # Representations: Rs = [(multiplicity, l), ...]
    Rs_in = [(4, 0), (2, 1)]   # dim_in  = 4*1 + 2*3 = 10
    Rs_out = [(6, 0), (2, 1)]  # dim_out = 6*1 + 2*3 = 12
    n_in = rs_dim(Rs_in)
    n_out = rs_dim(Rs_out)

    key, k_key, x_key, y_key = jax.random.split(key, 4)
    k = build_self_interaction_matrix(k_key, Rs_in, Rs_out)

    # Case 1: small batch (exercises the fold-pad path: Z=16 -> padded group).
    features = jax.random.normal(x_key, (2, 8, n_in), dtype=jnp.float32)
    out = jax.block_until_ready(self_interaction_pallas(features, k))
    ref = jnp.einsum("ij,...j->...i", k, features)
    assert out.shape == (2, 8, n_out)
    assert jnp.allclose(out, ref, atol=1e-5, rtol=1e-5)

    # Case 2: ragged Z not divisible by the fold or the sublane multiple.
    features2 = jax.random.normal(y_key, (3, 7, n_in), dtype=jnp.float32)
    out2 = jax.block_until_ready(self_interaction_pallas(features2, k))
    ref2 = jnp.einsum("ij,...j->...i", k, features2)
    assert out2.shape == (3, 7, n_out)
    assert jnp.allclose(out2, ref2, atol=1e-5, rtol=1e-5)

    # Case 3: bf16 features with f32 k (exercises the one-time kT cast).
    features3 = features.astype(jnp.bfloat16)
    out3 = jax.block_until_ready(self_interaction_pallas(features3, k))
    ref3 = jnp.einsum(
        "ij,...j->...i", k.astype(jnp.bfloat16), features3
    ).astype(jnp.bfloat16)
    assert out3.shape == (2, 8, n_out)
    assert jnp.allclose(
        out3.astype(jnp.float32), ref3.astype(jnp.float32), atol=3e-2, rtol=3e-2
    )

    print("KERNEL_OK")
</pallas_src>

<mosaic_0001>
module attributes {stable_mosaic.version = 11 : i64} {
  func.func @_self_interaction_kernel(%arg0: i32, %arg1: memref<640x768xf32, #tpu.memory_space<vmem>>, %arg2: memref<1x640xf32, #tpu.memory_space<vmem>>, %arg3: memref<1x768xf32, #tpu.memory_space<vmem>>) attributes {dimension_semantics = [#tpu.dimension_semantics<parallel>], iteration_bounds = array<i64: 1>, scalar_prefetch = 0 : i64, scratch_operands = 0 : i64, tpu.core_type = #tpu.core_type<tc>, window_params = [{pipeline_mode = #tpu.pipeline_mode<synchronous>, transform_indices = @transform_0, window_bounds = array<i64: 640, 768>}, {transform_indices = @transform_1, window_bounds = array<i64: 1, 640>}, {transform_indices = @transform_2, window_bounds = array<i64: 1, 768>}]} {
    %c0 = arith.constant 0 : index
    %c0_0 = arith.constant 0 : index
    %0 = vector.load %arg2[%c0, %c0_0] : memref<1x640xf32, #tpu.memory_space<vmem>>, vector<1x640xf32>
    %c0_1 = arith.constant 0 : index
    %c0_2 = arith.constant 0 : index
    %1 = vector.load %arg1[%c0_1, %c0_2] : memref<640x768xf32, #tpu.memory_space<vmem>>, vector<640x768xf32>
    %cst = arith.constant dense<0.000000e+00> : vector<1x768xf32>
    %2 = tpu.matmul %0, %1, %cst {dimension_numbers = #tpu.dot_dimension_numbers<[1], [0], [0], [1], [0, 0, 1, 1], [], []>} : vector<1x640xf32>, vector<640x768xf32>, vector<1x768xf32> -> vector<1x768xf32>
    %c0_3 = arith.constant 0 : index
    %c0_4 = arith.constant 0 : index
    %3 = vector.load %arg3[%c0_3, %c0_4] : memref<1x768xf32, #tpu.memory_space<vmem>>, vector<1x768xf32>
    tpu.vector_store %arg3[%c0_3, %c0_4], %2 {strides = array<i32>} : memref<1x768xf32, #tpu.memory_space<vmem>>, vector<1x768xf32>,
    return
  }
  func.func @transform_0(%arg0: i32) -> (i32, i32) {
    %c0_i32 = arith.constant 0 : i32
    %c0_i32_0 = arith.constant 0 : i32
    %c0_i32_1 = arith.constant 0 : i32
    return %c0_i32, %c0_i32_0 : i32, i32
  }
  func.func @transform_1(%arg0: i32) -> (i32, i32) {
    %c0_i32 = arith.constant 0 : i32
    %c0_i32_0 = arith.constant 0 : i32
    return %arg0, %c0_i32 : i32, i32
  }
  func.func @transform_2(%arg0: i32) -> (i32, i32) {
    %c0_i32 = arith.constant 0 : i32
    %c0_i32_0 = arith.constant 0 : i32
    return %arg0, %c0_i32 : i32, i32
  }
}

</mosaic_0001>

<llo_original>
// kernel: tpu_custom_call.1
$region0: #{tpu_custom_call.1}
  #allocation0 [shape = 'u32[]', space=smem, size = 0x4, offset = 0x4, fixed_abs, tag = 'smem constant byte address 0x4 - core index']
  #allocation1 [shape = 'u32[144,128]{1,0:T(1,128)}', space=vmem, size = 0x12000, scoped, tag = 'internal scratch']
  %s0 = inlined_call_operand.hbm [shape: f32[640,768], index: 0, kind: input, shape index: {}]
  %s1 = inlined_call_operand.hbm [shape: f32[1,640], index: 1, kind: input, shape index: {}]
  %s2 = inlined_call_operand.hbm [shape: f32[1,768], index: 2, kind: output, shape index: {}]
  %s3 = sld [smem:[#allocation0]]
  $region26: #{tpu_custom_call.1} parent=0
    _
  %s5 = ssub.s32 1, %s3
  %s6 = scalar_select 0, %s5, %s3
  $region1: #{tpu_custom_call.1} parent=0
    #allocation2 [shape = 'u8[1966080]{0}', space=vmem, size = 0x1e0000, scoped, tag = 'input window, operand 0, single buffered']
    #allocation3 [shape = 's32[1]{0}', space=sflag, size = 0x4, scoped, tag = 'scoped memory for tpu_custom_call.1']
    #allocation4 [shape = 's32[1]{0}', space=sflag, size = 0x4, scoped, tag = 'scoped memory for tpu_custom_call.1']
    #allocation5 [shape = 'u8[2560]{0}', space=vmem, size = 0xc00, scoped, tag = 'input window, operand 1, single buffered']
    #allocation6 [shape = 's32[1]{0}', space=sflag, size = 0x4, scoped, tag = 'scoped memory for tpu_custom_call.1']
    #allocation7 [shape = 'u8[3072]{0}', space=vmem, size = 0xc00, scoped, tag = 'output window, operand 0, single buffered']
    %7 = vsyncpa [#allocation3], 0
    %8 = vsyncpa [#allocation6], 0
    %9 = vsyncpa [#allocation4], 0
    // Predicated region
    $region2: #{tpu_custom_call.1} parent=1 // pred_check
      _
    $region3: #{tpu_custom_call.1} parent=1 // pred_check_branch
      %11 = sbr.rel (0) target = $region5
    $region4: #{tpu_custom_call.1} parent=1 // pred_region
      %s13 = ssub.s32 61440, 61440
      %14 = vsyncadd [#allocation3], %s13
      %s15 = sshll.u32 [#allocation2], 4
      %s16 = int_to_ptr.vmem [resolvable:$true] %s15
      %21 = dma.hbm_to_vmem [thread:$0]  %s0, 61440, %s16, [#allocation3], 768, 768, 48
    $region5: #{tpu_custom_call.1} parent=1 // pred_fallthru
      _
    // Predicated region
    $region6: #{tpu_custom_call.1} parent=1 // pred_check
      _
    $region7: #{tpu_custom_call.1} parent=1 // pred_check_branch
      %23 = sbr.rel (0) target = $region9
    $region8: #{tpu_custom_call.1} parent=1 // pred_region
      %s25 = ssub.s32 80, 80
      %26 = vsyncadd [#allocation6], %s25
      %s28 = sshll.u32 [#allocation5], 4
      %s29 = int_to_ptr.vmem [resolvable:$true] %s28
      %31 = dma.hbm_to_vmem [thread:$0]  %s1, 80, %s29, [#allocation6]
    $region9: #{tpu_custom_call.1} parent=1 // pred_fallthru
      _
    // Predicated region
    $region10: #{tpu_custom_call.1} parent=1 // pred_check
      _
    $region11: #{tpu_custom_call.1} parent=1 // pred_check_branch
      %33 = sbr.rel (0) target = $region13
    $region12: #{tpu_custom_call.1} parent=1 // pred_region
      %34 = dma.done [#allocation3], 61440
    $region13: #{tpu_custom_call.1} parent=1 // pred_fallthru
      _
    // Predicated region
    $region14: #{tpu_custom_call.1} parent=1 // pred_check
      _
    $region15: #{tpu_custom_call.1} parent=1 // pred_check_branch
      %36 = sbr.rel (0) target = $region17
    $region16: #{tpu_custom_call.1} parent=1 // pred_region
      %37 = dma.done [#allocation6], 80
    $region17: #{tpu_custom_call.1} parent=1 // pred_fallthru
      _
    %v38 = vld [vmem:[#allocation5] sm:$0x1f]
    %v39 = vld [vmem:[#allocation2] sm:$0xff]
    %v40 = vld [vmem:[#allocation2 + $0x8] sm:$0xff]
    %v41 = vld [vmem:[#allocation2 + $0x10] sm:$0xff]
    %v42 = vld [vmem:[#allocation2 + $0x18] sm:$0xff]
    %v43 = vld [vmem:[#allocation2 + $0x20] sm:$0xff]
    %v44 = vld [vmem:[#allocation2 + $0x28] sm:$0xff]
    %v45 = vld [vmem:[#allocation2 + $0x30] sm:$0xff]
    %v46 = vld [vmem:[#allocation2 + $0x38] sm:$0xff]
    %v47 = vld [vmem:[#allocation2 + $0x40] sm:$0xff]
    %v48 = vld [vmem:[#allocation2 + $0x48] sm:$0xff]
    %v49 = vld [vmem:[#allocation2 + $0x50] sm:$0xff]
    %v50 = vld [vmem:[#allocation2 + $0x58] sm:$0xff]
    %v51 = vld [vmem:[#allocation2 + $0x60] sm:$0xff]
    %v52 = vld [vmem:[#allocation2 + $0x68] sm:$0xff]
    %v53 = vld [vmem:[#allocation2 + $0x70] sm:$0xff]
    %v54 = vld [vmem:[#allocation2 + $0x78] sm:$0xff]
    %v55 = vld [vmem:[#allocation2 + $0x80] sm:$0xff]
    %v56 = vld [vmem:[#allocation2 + $0x88] sm:$0xff]
    %v57 = vld [vmem:[#allocation2 + $0x90] sm:$0xff]
    %v58 = vld [vmem:[#allocation2 + $0x98] sm:$0xff]
    %v59 = vld [vmem:[#allocation2 + $0xa0] sm:$0xff]
    %v60 = vld [vmem:[#allocation2 + $0xa8] sm:$0xff]
    %v61 = vld [vmem:[#allocation2 + $0xb0] sm:$0xff]
    %v62 = vld [vmem:[#allocation2 + $0xb8] sm:$0xff]
    %v63 = vld [vmem:[#allocation2 + $0xc0] sm:$0xff]
    %v64 = vld [vmem:[#allocation2 + $0xc8] sm:$0xff]
    %v65 = vld [vmem:[#allocation2 + $0xd0] sm:$0xff]
    %v66 = vld [vmem:[#allocation2 + $0xd8] sm:$0xff]
    %v67 = vld [vmem:[#allocation2 + $0xe0] sm:$0xff]
    %v68 = vld [vmem:[#allocation2 + $0xe8] sm:$0xff]
    %v69 = vld [vmem:[#allocation2 + $0xf0] sm:$0xff]
    %v70 = vld [vmem:[#allocation2 + $0xf8] sm:$0xff]
    %v71 = vld [vmem:[#allocation2 + $0x100] sm:$0xff]
    %v72 = vld [vmem:[#allocation2 + $0x108] sm:$0xff]
    %v73 = vld [vmem:[#allocation2 + $0x110] sm:$0xff]
    %v74 = vld [vmem:[#allocation2 + $0x118] sm:$0xff]
    %v75 = vld [vmem:[#allocation2 + $0x120] sm:$0xff]
    %v76 = vld [vmem:[#allocation2 + $0x128] sm:$0xff]
    %v77 = vld [vmem:[#allocation2 + $0x130] sm:$0xff]
    %v78 = vld [vmem:[#allocation2 + $0x138] sm:$0xff]
    %v79 = vld [vmem:[#allocation2 + $0x140] sm:$0xff]
    %v80 = vld [vmem:[#allocation2 + $0x148] sm:$0xff]
    %v81 = vld [vmem:[#allocation2 + $0x150] sm:$0xff]
    %v82 = vld [vmem:[#allocation2 + $0x158] sm:$0xff]
    %v83 = vld [vmem:[#allocation2 + $0x160] sm:$0xff]
    %v84 = vld [vmem:[#allocation2 + $0x168] sm:$0xff]
    %v85 = vld [vmem:[#allocation2 + $0x170] sm:$0xff]
    %v86 = vld [vmem:[#allocation2 + $0x178] sm:$0xff]
    %v87 = vld [vmem:[#allocation2 + $0x180] sm:$0xff]
    %v88 = vld [vmem:[#allocation2 + $0x188] sm:$0xff]
    %v89 = vld [vmem:[#allocation2 + $0x190] sm:$0xff]
    %v90 = vld [vmem:[#allocation2 + $0x198] sm:$0xff]
    %v91 = vld [vmem:[#allocation2 + $0x1a0] sm:$0xff]
    %v92 = vld [vmem:[#allocation2 + $0x1a8] sm:$0xff]
    %v93 = vld [vmem:[#allocation2 + $0x1b0] sm:$0xff]
    %v94 = vld [vmem:[#allocation2 + $0x1b8] sm:$0xff]
    %v95 = vld [vmem:[#allocation2 + $0x1c0] sm:$0xff]
    %v96 = vld [vmem:[#allocation2 + $0x1c8] sm:$0xff]
    %v97 = vld [vmem:[#allocation2 + $0x1d0] sm:$0xff]
    %v98 = vld [vmem:[#allocation2 + $0x1d8] sm:$0xff]
    %v99 = vld [vmem:[#allocation2 + $0x1e0] sm:$0xff]
    %v100 = vld [vmem:[#allocation2 + $0x1e8] sm:$0xff]
    %v101 = vld [vmem:[#allocation2 + $0x1f0] sm:$0xff]
    %v102 = vld [vmem:[#allocation2 + $0x1f8] sm:$0xff]
    %v103 = vld [vmem:[#allocation2 + $0x200] sm:$0xff]
    %v104 = vld [vmem:[#allocation2 + $0x208] sm:$0xff]
    %v105 = vld [vmem:[#allocation2 + $0x210] sm:$0xff]
    %v106 = vld [vmem:[#allocation2 + $0x218] sm:$0xff]
    %v107 = vld [vmem:[#allocation2 + $0x220] sm:$0xff]
    %v108 = vld [vmem:[#allocation2 + $0x228] sm:$0xff]
    %v109 = vld [vmem:[#allocation2 + $0x230] sm:$0xff]
    %v110 = vld [vmem:[#allocation2 + $0x238] sm:$0xff]
    %v111 = vld [vmem:[#allocation2 + $0x240] sm:$0xff]
    %v112 = vld [vmem:[#allocation2 + $0x248] sm:$0xff]
    %v113 = vld [vmem:[#allocation2 + $0x250] sm:$0xff]
    %v114 = vld [vmem:[#allocation2 + $0x258] sm:$0xff]
    %v115 = vld [vmem:[#allocation2 + $0x260] sm:$0xff]
    %v116 = vld [vmem:[#allocation2 + $0x268] sm:$0xff]
    %v117 = vld [vmem:[#allocation2 + $0x270] sm:$0xff]
    %v118 = vld [vmem:[#allocation2 + $0x278] sm:$0xff]
    %v119 = vld [vmem:[#allocation2 + $0x280] sm:$0xff]
    %v120 = vld [vmem:[#allocation2 + $0x288] sm:$0xff]
    %v121 = vld [vmem:[#allocation2 + $0x290] sm:$0xff]
    %v122 = vld [vmem:[#allocation2 + $0x298] sm:$0xff]
    %v123 = vld [vmem:[#allocation2 + $0x2a0] sm:$0xff]
    %v124 = vld [vmem:[#allocation2 + $0x2a8] sm:$0xff]
    %v125 = vld [vmem:[#allocation2 + $0x2b0] sm:$0xff]
    %v126 = vld [vmem:[#allocation2 + $0x2b8] sm:$0xff]
    %v127 = vld [vmem:[#allocation2 + $0x2c0] sm:$0xff]
    %v128 = vld [vmem:[#allocation2 + $0x2c8] sm:$0xff]
    %v129 = vld [vmem:[#allocation2 + $0x2d0] sm:$0xff]
    %v130 = vld [vmem:[#allocation2 + $0x2d8] sm:$0xff]
    %v131 = vld [vmem:[#allocation2 + $0x2e0] sm:$0xff]
    %v132 = vld [vmem:[#allocation2 + $0x2e8] sm:$0xff]
    %v133 = vld [vmem:[#allocation2 + $0x2f0] sm:$0xff]
    %v134 = vld [vmem:[#allocation2 + $0x2f8] sm:$0xff]
    %v135 = vld [vmem:[#allocation2 + $0x300] sm:$0xff]
    %v136 = vld [vmem:[#allocation2 + $0x308] sm:$0xff]
    %v137 = vld [vmem:[#allocation2 + $0x310] sm:$0xff]
    %v138 = vld [vmem:[#allocation2 + $0x318] sm:$0xff]
    %v139 = vld [vmem:[#allocation2 + $0x320] sm:$0xff]
    %v140 = vld [vmem:[#allocation2 + $0x328] sm:$0xff]
    %v141 = vld [vmem:[#allocation2 + $0x330] sm:$0xff]
    %v142 = vld [vmem:[#allocation2 + $0x338] sm:$0xff]
    %v143 = vld [vmem:[#allocation2 + $0x340] sm:$0xff]
    %v144 = vld [vmem:[#allocation2 + $0x348] sm:$0xff]
    %v145 = vld [vmem:[#allocation2 + $0x350] sm:$0xff]
    %v146 = vld [vmem:[#allocation2 + $0x358] sm:$0xff]
    %v147 = vld [vmem:[#allocation2 + $0x360] sm:$0xff]
    %v148 = vld [vmem:[#allocation2 + $0x368] sm:$0xff]
    %v149 = vld [vmem:[#allocation2 + $0x370] sm:$0xff]
    %v150 = vld [vmem:[#allocation2 + $0x378] sm:$0xff]
    %v151 = vld [vmem:[#allocation2 + $0x380] sm:$0xff]
    %v152 = vld [vmem:[#allocation2 + $0x388] sm:$0xff]
    %v153 = vld [vmem:[#allocation2 + $0x390] sm:$0xff]
    %v154 = vld [vmem:[#allocation2 + $0x398] sm:$0xff]
    %v155 = vld [vmem:[#allocation2 + $0x3a0] sm:$0xff]
    %v156 = vld [vmem:[#allocation2 + $0x3a8] sm:$0xff]
    %v157 = vld [vmem:[#allocation2 + $0x3b0] sm:$0xff]
    %v158 = vld [vmem:[#allocation2 + $0x3b8] sm:$0xff]
    %v159 = vld [vmem:[#allocation2 + $0x3c0] sm:$0xff]
    %v160 = vld [vmem:[#allocation2 + $0x3c8] sm:$0xff]
    %v161 = vld [vmem:[#allocation2 + $0x3d0] sm:$0xff]
    %v162 = vld [vmem:[#allocation2 + $0x3d8] sm:$0xff]
    %v163 = vld [vmem:[#allocation2 + $0x3e0] sm:$0xff]
    %v164 = vld [vmem:[#allocation2 + $0x3e8] sm:$0xff]
    %v165 = vld [vmem:[#allocation2 + $0x3f0] sm:$0xff]
    %v166 = vld [vmem:[#allocation2 + $0x3f8] sm:$0xff]
    %v167 = vld [vmem:[#allocation2 + $0x400] sm:$0xff]
    %v168 = vld [vmem:[#allocation2 + $0x408] sm:$0xff]
    %v169 = vld [vmem:[#allocation2 + $0x410] sm:$0xff]
    %v170 = vld [vmem:[#allocation2 + $0x418] sm:$0xff]
    %v171 = vld [vmem:[#allocation2 + $0x420] sm:$0xff]
    %v172 = vld [vmem:[#allocation2 + $0x428] sm:$0xff]
    %v173 = vld [vmem:[#allocation2 + $0x430] sm:$0xff]
    %v174 = vld [vmem:[#allocation2 + $0x438] sm:$0xff]
    %v175 = vld [vmem:[#allocation2 + $0x440] sm:$0xff]
    %v176 = vld [vmem:[#allocation2 + $0x448] sm:$0xff]
    %v177 = vld [vmem:[#allocation2 + $0x450] sm:$0xff]
    %v178 = vld [vmem:[#allocation2 + $0x458] sm:$0xff]
    %v179 = vld [vmem:[#allocation2 + $0x460] sm:$0xff]
    %v180 = vld [vmem:[#allocation2 + $0x468] sm:$0xff]
    %v181 = vld [vmem:[#allocation2 + $0x470] sm:$0xff]
    %v182 = vld [vmem:[#allocation2 + $0x478] sm:$0xff]
    %v183 = vld [vmem:[#allocation2 + $0x480] sm:$0xff]
    %v184 = vld [vmem:[#allocation2 + $0x488] sm:$0xff]
    %v185 = vld [vmem:[#allocation2 + $0x490] sm:$0xff]
    %v186 = vld [vmem:[#allocation2 + $0x498] sm:$0xff]
    %v187 = vld [vmem:[#allocation2 + $0x4a0] sm:$0xff]
    %v188 = vld [vmem:[#allocation2 + $0x4a8] sm:$0xff]
    %v189 = vld [vmem:[#allocation2 + $0x4b0] sm:$0xff]
    %v190 = vld [vmem:[#allocation2 + $0x4b8] sm:$0xff]
    %v191 = vld [vmem:[#allocation2 + $0x4c0] sm:$0xff]
    %v192 = vld [vmem:[#allocation2 + $0x4c8] sm:$0xff]
    %v193 = vld [vmem:[#allocation2 + $0x4d0] sm:$0xff]
    %v194 = vld [vmem:[#allocation2 + $0x4d8] sm:$0xff]
    %v195 = vld [vmem:[#allocation2 + $0x4e0] sm:$0xff]
    %v196 = vld [vmem:[#allocation2 + $0x4e8] sm:$0xff]
    %v197 = vld [vmem:[#allocation2 + $0x4f0] sm:$0xff]
    %v198 = vld [vmem:[#allocation2 + $0x4f8] sm:$0xff]
    %v199 = vld [vmem:[#allocation2 + $0x500] sm:$0xff]
    %v200 = vld [vmem:[#allocation2 + $0x508] sm:$0xff]
    %v201 = vld [vmem:[#allocation2 + $0x510] sm:$0xff]
    %v202 = vld [vmem:[#allocation2 + $0x518] sm:$0xff]
    %v203 = vld [vmem:[#allocation2 + $0x520] sm:$0xff]
    %v204 = vld [vmem:[#allocation2 + $0x528] sm:$0xff]
    %v205 = vld [vmem:[#allocation2 + $0x530] sm:$0xff]
    %v206 = vld [vmem:[#allocation2 + $0x538] sm:$0xff]
    %v207 = vld [vmem:[#allocation2 + $0x540] sm:$0xff]
    %v208 = vld [vmem:[#allocation2 + $0x548] sm:$0xff]
    %v209 = vld [vmem:[#allocation2 + $0x550] sm:$0xff]
    %v210 = vld [vmem:[#allocation2 + $0x558] sm:$0xff]
    %v211 = vld [vmem:[#allocation2 + $0x560] sm:$0xff]
    %v212 = vld [vmem:[#allocation2 + $0x568] sm:$0xff]
    %v213 = vld [vmem:[#allocation2 + $0x570] sm:$0xff]
    %v214 = vld [vmem:[#allocation2 + $0x578] sm:$0xff]
    %v215 = vld [vmem:[#allocation2 + $0x580] sm:$0xff]
    %v216 = vld [vmem:[#allocation2 + $0x588] sm:$0xff]
    %v217 = vld [vmem:[#allocation2 + $0x590] sm:$0xff]
    %v218 = vld [vmem:[#allocation2 + $0x598] sm:$0xff]
    %v219 = vld [vmem:[#allocation2 + $0x5a0] sm:$0xff]
    %v220 = vld [vmem:[#allocation2 + $0x5a8] sm:$0xff]
    %v221 = vld [vmem:[#allocation2 + $0x5b0] sm:$0xff]
    %v222 = vld [vmem:[#allocation2 + $0x5b8] sm:$0xff]
    %v223 = vld [vmem:[#allocation2 + $0x5c0] sm:$0xff]
    %v224 = vld [vmem:[#allocation2 + $0x5c8] sm:$0xff]
    %v225 = vld [vmem:[#allocation2 + $0x5d0] sm:$0xff]
    %v226 = vld [vmem:[#allocation2 + $0x5d8] sm:$0xff]
    %v227 = vld [vmem:[#allocation2 + $0x5e0] sm:$0xff]
    %v228 = vld [vmem:[#allocation2 + $0x5e8] sm:$0xff]
    %v229 = vld [vmem:[#allocation2 + $0x5f0] sm:$0xff]
    %v230 = vld [vmem:[#allocation2 + $0x5f8] sm:$0xff]
    %v231 = vld [vmem:[#allocation2 + $0x600] sm:$0xff]
    %v232 = vld [vmem:[#allocation2 + $0x608] sm:$0xff]
    %v233 = vld [vmem:[#allocation2 + $0x610] sm:$0xff]
    %v234 = vld [vmem:[#allocation2 + $0x618] sm:$0xff]
    %v235 = vld [vmem:[#allocation2 + $0x620] sm:$0xff]
    %v236 = vld [vmem:[#allocation2 + $0x628] sm:$0xff]
    %v237 = vld [vmem:[#allocation2 + $0x630] sm:$0xff]
    %v238 = vld [vmem:[#allocation2 + $0x638] sm:$0xff]
    %v239 = vld [vmem:[#allocation2 + $0x640] sm:$0xff]
    %v240 = vld [vmem:[#allocation2 + $0x648] sm:$0xff]
    %v241 = vld [vmem:[#allocation2 + $0x650] sm:$0xff]
    %v242 = vld [vmem:[#allocation2 + $0x658] sm:$0xff]
    %v243 = vld [vmem:[#allocation2 + $0x660] sm:$0xff]
    %v244 = vld [vmem:[#allocation2 + $0x668] sm:$0xff]
    %v245 = vld [vmem:[#allocation2 + $0x670] sm:$0xff]
    %v246 = vld [vmem:[#allocation2 + $0x678] sm:$0xff]
    %v247 = vld [vmem:[#allocation2 + $0x680] sm:$0xff]
    %v248 = vld [vmem:[#allocation2 + $0x688] sm:$0xff]
    %v249 = vld [vmem:[#allocation2 + $0x690] sm:$0xff]
    %v250 = vld [vmem:[#allocation2 + $0x698] sm:$0xff]
    %v251 = vld [vmem:[#allocation2 + $0x6a0] sm:$0xff]
    %v252 = vld [vmem:[#allocation2 + $0x6a8] sm:$0xff]
    %v253 = vld [vmem:[#allocation2 + $0x6b0] sm:$0xff]
    %v254 = vld [vmem:[#allocation2 + $0x6b8] sm:$0xff]
    %v255 = vld [vmem:[#allocation2 + $0x6c0] sm:$0xff]
    %v256 = vld [vmem:[#allocation2 + $0x6c8] sm:$0xff]
    %v257 = vld [vmem:[#allocation2 + $0x6d0] sm:$0xff]
    %v258 = vld [vmem:[#allocation2 + $0x6d8] sm:$0xff]
    %v259 = vld [vmem:[#allocation2 + $0x6e0] sm:$0xff]
    %v260 = vld [vmem:[#allocation2 + $0x6e8] sm:$0xff]
    %v261 = vld [vmem:[#allocation2 + $0x6f0] sm:$0xff]
    %v262 = vld [vmem:[#allocation2 + $0x6f8] sm:$0xff]
    %v263 = vld [vmem:[#allocation2 + $0x700] sm:$0xff]
    %v264 = vld [vmem:[#allocation2 + $0x708] sm:$0xff]
    %v265 = vld [vmem:[#allocation2 + $0x710] sm:$0xff]
    %v266 = vld [vmem:[#allocation2 + $0x718] sm:$0xff]
    %v267 = vld [vmem:[#allocation2 + $0x720] sm:$0xff]
    %v268 = vld [vmem:[#allocation2 + $0x728] sm:$0xff]
    %v269 = vld [vmem:[#allocation2 + $0x730] sm:$0xff]
    %v270 = vld [vmem:[#allocation2 + $0x738] sm:$0xff]
    %v271 = vld [vmem:[#allocation2 + $0x740] sm:$0xff]
    %v272 = vld [vmem:[#allocation2 + $0x748] sm:$0xff]
    %v273 = vld [vmem:[#allocation2 + $0x750] sm:$0xff]
    %v274 = vld [vmem:[#allocation2 + $0x758] sm:$0xff]
    %v275 = vld [vmem:[#allocation2 + $0x760] sm:$0xff]
    %v276 = vld [vmem:[#allocation2 + $0x768] sm:$0xff]
    %v277 = vld [vmem:[#allocation2 + $0x770] sm:$0xff]
    %v278 = vld [vmem:[#allocation2 + $0x778] sm:$0xff]
    %v279 = vld [vmem:[#allocation2 + $0x780] sm:$0xff]
    %v280 = vld [vmem:[#allocation2 + $0x788] sm:$0xff]
    %v281 = vld [vmem:[#allocation2 + $0x790] sm:$0xff]
    %v282 = vld [vmem:[#allocation2 + $0x798] sm:$0xff]
    %v283 = vld [vmem:[#allocation2 + $0x7a0] sm:$0xff]
    %v284 = vld [vmem:[#allocation2 + $0x7a8] sm:$0xff]
    %v285 = vld [vmem:[#allocation2 + $0x7b0] sm:$0xff]
    %v286 = vld [vmem:[#allocation2 + $0x7b8] sm:$0xff]
    %v287 = vld [vmem:[#allocation2 + $0x7c0] sm:$0xff]
    %v288 = vld [vmem:[#allocation2 + $0x7c8] sm:$0xff]
    %v289 = vld [vmem:[#allocation2 + $0x7d0] sm:$0xff]
    %v290 = vld [vmem:[#allocation2 + $0x7d8] sm:$0xff]
    %v291 = vld [vmem:[#allocation2 + $0x7e0] sm:$0xff]
    %v292 = vld [vmem:[#allocation2 + $0x7e8] sm:$0xff]
    %v293 = vld [vmem:[#allocation2 + $0x7f0] sm:$0xff]
    %v294 = vld [vmem:[#allocation2 + $0x7f8] sm:$0xff]
    %v295 = vld [vmem:[#allocation2 + $0x800] sm:$0xff]
    %v296 = vld [vmem:[#allocation2 + $0x808] sm:$0xff]
    %v297 = vld [vmem:[#allocation2 + $0x810] sm:$0xff]
    %v298 = vld [vmem:[#allocation2 + $0x818] sm:$0xff]
    %v299 = vld [vmem:[#allocation2 + $0x820] sm:$0xff]
    %v300 = vld [vmem:[#allocation2 + $0x828] sm:$0xff]
    %v301 = vld [vmem:[#allocation2 + $0x830] sm:$0xff]
    %v302 = vld [vmem:[#allocation2 + $0x838] sm:$0xff]
    %v303 = vld [vmem:[#allocation2 + $0x840] sm:$0xff]
    %v304 = vld [vmem:[#allocation2 + $0x848] sm:$0xff]
    %v305 = vld [vmem:[#allocation2 + $0x850] sm:$0xff]
    %v306 = vld [vmem:[#allocation2 + $0x858] sm:$0xff]
    %v307 = vld [vmem:[#allocation2 + $0x860] sm:$0xff]
    %v308 = vld [vmem:[#allocation2 + $0x868] sm:$0xff]
    %v309 = vld [vmem:[#allocation2 + $0x870] sm:$0xff]
    %v310 = vld [vmem:[#allocation2 + $0x878] sm:$0xff]
    %v311 = vld [vmem:[#allocation2 + $0x880] sm:$0xff]
    %v312 = vld [vmem:[#allocation2 + $0x888] sm:$0xff]
    %v313 = vld [vmem:[#allocation2 + $0x890] sm:$0xff]
    %v314 = vld [vmem:[#allocation2 + $0x898] sm:$0xff]
    %v315 = vld [vmem:[#allocation2 + $0x8a0] sm:$0xff]
    %v316 = vld [vmem:[#allocation2 + $0x8a8] sm:$0xff]
    %v317 = vld [vmem:[#allocation2 + $0x8b0] sm:$0xff]
    %v318 = vld [vmem:[#allocation2 + $0x8b8] sm:$0xff]
    %v319 = vld [vmem:[#allocation2 + $0x8c0] sm:$0xff]
    %v320 = vld [vmem:[#allocation2 + $0x8c8] sm:$0xff]
    %v321 = vld [vmem:[#allocation2 + $0x8d0] sm:$0xff]
    %v322 = vld [vmem:[#allocation2 + $0x8d8] sm:$0xff]
    %v323 = vld [vmem:[#allocation2 + $0x8e0] sm:$0xff]
    %v324 = vld [vmem:[#allocation2 + $0x8e8] sm:$0xff]
    %v325 = vld [vmem:[#allocation2 + $0x8f0] sm:$0xff]
    %v326 = vld [vmem:[#allocation2 + $0x8f8] sm:$0xff]
    %v327 = vld [vmem:[#allocation2 + $0x900] sm:$0xff]
    %v328 = vld [vmem:[#allocation2 + $0x908] sm:$0xff]
    %v329 = vld [vmem:[#allocation2 + $0x910] sm:$0xff]
    %v330 = vld [vmem:[#allocation2 + $0x918] sm:$0xff]
    %v331 = vld [vmem:[#allocation2 + $0x920] sm:$0xff]
    %v332 = vld [vmem:[#allocation2 + $0x928] sm:$0xff]
    %v333 = vld [vmem:[#allocation2 + $0x930] sm:$0xff]
    %v334 = vld [vmem:[#allocation2 + $0x938] sm:$0xff]
    %v335 = vld [vmem:[#allocation2 + $0x940] sm:$0xff]
    %v336 = vld [vmem:[#allocation2 + $0x948] sm:$0xff]
    %v337 = vld [vmem:[#allocation2 + $0x950] sm:$0xff]
    %v338 = vld [vmem:[#allocation2 + $0x958] sm:$0xff]
    %v339 = vld [vmem:[#allocation2 + $0x960] sm:$0xff]
    %v340 = vld [vmem:[#allocation2 + $0x968] sm:$0xff]
    %v341 = vld [vmem:[#allocation2 + $0x970] sm:$0xff]
    %v342 = vld [vmem:[#allocation2 + $0x978] sm:$0xff]
    %v343 = vld [vmem:[#allocation2 + $0x980] sm:$0xff]
    %v344 = vld [vmem:[#allocation2 + $0x988] sm:$0xff]
    %v345 = vld [vmem:[#allocation2 + $0x990] sm:$0xff]
    %v346 = vld [vmem:[#allocation2 + $0x998] sm:$0xff]
    %v347 = vld [vmem:[#allocation2 + $0x9a0] sm:$0xff]
    %v348 = vld [vmem:[#allocation2 + $0x9a8] sm:$0xff]
    %v349 = vld [vmem:[#allocation2 + $0x9b0] sm:$0xff]
    %v350 = vld [vmem:[#allocation2 + $0x9b8] sm:$0xff]
    %v351 = vld [vmem:[#allocation2 + $0x9c0] sm:$0xff]
    %v352 = vld [vmem:[#allocation2 + $0x9c8] sm:$0xff]
    %v353 = vld [vmem:[#allocation2 + $0x9d0] sm:$0xff]
    %v354 = vld [vmem:[#allocation2 + $0x9d8] sm:$0xff]
    %v355 = vld [vmem:[#allocation2 + $0x9e0] sm:$0xff]
    %v356 = vld [vmem:[#allocation2 + $0x9e8] sm:$0xff]
    %v357 = vld [vmem:[#allocation2 + $0x9f0] sm:$0xff]
    %v358 = vld [vmem:[#allocation2 + $0x9f8] sm:$0xff]
    %v359 = vld [vmem:[#allocation2 + $0xa00] sm:$0xff]
    %v360 = vld [vmem:[#allocation2 + $0xa08] sm:$0xff]
    %v361 = vld [vmem:[#allocation2 + $0xa10] sm:$0xff]
    %v362 = vld [vmem:[#allocation2 + $0xa18] sm:$0xff]
    %v363 = vld [vmem:[#allocation2 + $0xa20] sm:$0xff]
    %v364 = vld [vmem:[#allocation2 + $0xa28] sm:$0xff]
    %v365 = vld [vmem:[#allocation2 + $0xa30] sm:$0xff]
    %v366 = vld [vmem:[#allocation2 + $0xa38] sm:$0xff]
    %v367 = vld [vmem:[#allocation2 + $0xa40] sm:$0xff]
    %v368 = vld [vmem:[#allocation2 + $0xa48] sm:$0xff]
    %v369 = vld [vmem:[#allocation2 + $0xa50] sm:$0xff]
    %v370 = vld [vmem:[#allocation2 + $0xa58] sm:$0xff]
    %v371 = vld [vmem:[#allocation2 + $0xa60] sm:$0xff]
    %v372 = vld [vmem:[#allocation2 + $0xa68] sm:$0xff]
    %v373 = vld [vmem:[#allocation2 + $0xa70] sm:$0xff]
    %v374 = vld [vmem:[#allocation2 + $0xa78] sm:$0xff]
    %v375 = vld [vmem:[#allocation2 + $0xa80] sm:$0xff]
    %v376 = vld [vmem:[#allocation2 + $0xa88] sm:$0xff]
    %v377 = vld [vmem:[#allocation2 + $0xa90] sm:$0xff]
    %v378 = vld [vmem:[#allocation2 + $0xa98] sm:$0xff]
    %v379 = vld [vmem:[#allocation2 + $0xaa0] sm:$0xff]
    %v380 = vld [vmem:[#allocation2 + $0xaa8] sm:$0xff]
    %v381 = vld [vmem:[#allocation2 + $0xab0] sm:$0xff]
    %v382 = vld [vmem:[#allocation2 + $0xab8] sm:$0xff]
    %v383 = vld [vmem:[#allocation2 + $0xac0] sm:$0xff]
    %v384 = vld [vmem:[#allocation2 + $0xac8] sm:$0xff]
    %v385 = vld [vmem:[#allocation2 + $0xad0] sm:$0xff]
    %v386 = vld [vmem:[#allocation2 + $0xad8] sm:$0xff]
    %v387 = vld [vmem:[#allocation2 + $0xae0] sm:$0xff]
    %v388 = vld [vmem:[#allocation2 + $0xae8] sm:$0xff]
    %v389 = vld [vmem:[#allocation2 + $0xaf0] sm:$0xff]
    %v390 = vld [vmem:[#allocation2 + $0xaf8] sm:$0xff]
    %v391 = vld [vmem:[#allocation2 + $0xb00] sm:$0xff]
    %v392 = vld [vmem:[#allocation2 + $0xb08] sm:$0xff]
    %v393 = vld [vmem:[#allocation2 + $0xb10] sm:$0xff]
    %v394 = vld [vmem:[#allocation2 + $0xb18] sm:$0xff]
    %v395 = vld [vmem:[#allocation2 + $0xb20] sm:$0xff]
    %v396 = vld [vmem:[#allocation2 + $0xb28] sm:$0xff]
    %v397 = vld [vmem:[#allocation2 + $0xb30] sm:$0xff]
    %v398 = vld [vmem:[#allocation2 + $0xb38] sm:$0xff]
    %v399 = vld [vmem:[#allocation2 + $0xb40] sm:$0xff]
    %v400 = vld [vmem:[#allocation2 + $0xb48] sm:$0xff]
    %v401 = vld [vmem:[#allocation2 + $0xb50] sm:$0xff]
    %v402 = vld [vmem:[#allocation2 + $0xb58] sm:$0xff]
    %v403 = vld [vmem:[#allocation2 + $0xb60] sm:$0xff]
    %v404 = vld [vmem:[#allocation2 + $0xb68] sm:$0xff]
    %v405 = vld [vmem:[#allocation2 + $0xb70] sm:$0xff]
    %v406 = vld [vmem:[#allocation2 + $0xb78] sm:$0xff]
    %v407 = vld [vmem:[#allocation2 + $0xb80] sm:$0xff]
    %v408 = vld [vmem:[#allocation2 + $0xb88] sm:$0xff]
    %v409 = vld [vmem:[#allocation2 + $0xb90] sm:$0xff]
    %v410 = vld [vmem:[#allocation2 + $0xb98] sm:$0xff]
    %v411 = vld [vmem:[#allocation2 + $0xba0] sm:$0xff]
    %v412 = vld [vmem:[#allocation2 + $0xba8] sm:$0xff]
    %v413 = vld [vmem:[#allocation2 + $0xbb0] sm:$0xff]
    %v414 = vld [vmem:[#allocation2 + $0xbb8] sm:$0xff]
    %v415 = vld [vmem:[#allocation2 + $0xbc0] sm:$0xff]
    %v416 = vld [vmem:[#allocation2 + $0xbc8] sm:$0xff]
    %v417 = vld [vmem:[#allocation2 + $0xbd0] sm:$0xff]
    %v418 = vld [vmem:[#allocation2 + $0xbd8] sm:$0xff]
    %v419 = vld [vmem:[#allocation2 + $0xbe0] sm:$0xff]
    %v420 = vld [vmem:[#allocation2 + $0xbe8] sm:$0xff]
    %v421 = vld [vmem:[#allocation2 + $0xbf0] sm:$0xff]
    %v422 = vld [vmem:[#allocation2 + $0xbf8] sm:$0xff]
    %v423 = vld [vmem:[#allocation2 + $0xc00] sm:$0xff]
    %v424 = vld [vmem:[#allocation2 + $0xc08] sm:$0xff]
    %v425 = vld [vmem:[#allocation2 + $0xc10] sm:$0xff]
    %v426 = vld [vmem:[#allocation2 + $0xc18] sm:$0xff]
    %v427 = vld [vmem:[#allocation2 + $0xc20] sm:$0xff]
    %v428 = vld [vmem:[#allocation2 + $0xc28] sm:$0xff]
    %v429 = vld [vmem:[#allocation2 + $0xc30] sm:$0xff]
    %v430 = vld [vmem:[#allocation2 + $0xc38] sm:$0xff]
    %v431 = vld [vmem:[#allocation2 + $0xc40] sm:$0xff]
    %v432 = vld [vmem:[#allocation2 + $0xc48] sm:$0xff]
    %v433 = vld [vmem:[#allocation2 + $0xc50] sm:$0xff]
    %v434 = vld [vmem:[#allocation2 + $0xc58] sm:$0xff]
    %v435 = vld [vmem:[#allocation2 + $0xc60] sm:$0xff]
    %v436 = vld [vmem:[#allocation2 + $0xc68] sm:$0xff]
    %v437 = vld [vmem:[#allocation2 + $0xc70] sm:$0xff]
    %v438 = vld [vmem:[#allocation2 + $0xc78] sm:$0xff]
    %v439 = vld [vmem:[#allocation2 + $0xc80] sm:$0xff]
    %v440 = vld [vmem:[#allocation2 + $0xc88] sm:$0xff]
    %v441 = vld [vmem:[#allocation2 + $0xc90] sm:$0xff]
    %v442 = vld [vmem:[#allocation2 + $0xc98] sm:$0xff]
    %v443 = vld [vmem:[#allocation2 + $0xca0] sm:$0xff]
    %v444 = vld [vmem:[#allocation2 + $0xca8] sm:$0xff]
    %v445 = vld [vmem:[#allocation2 + $0xcb0] sm:$0xff]
    %v446 = vld [vmem:[#allocation2 + $0xcb8] sm:$0xff]
    %v447 = vld [vmem:[#allocation2 + $0xcc0] sm:$0xff]
    %v448 = vld [vmem:[#allocation2 + $0xcc8] sm:$0xff]
    %v449 = vld [vmem:[#allocation2 + $0xcd0] sm:$0xff]
    %v450 = vld [vmem:[#allocation2 + $0xcd8] sm:$0xff]
    %v451 = vld [vmem:[#allocation2 + $0xce0] sm:$0xff]
    %v452 = vld [vmem:[#allocation2 + $0xce8] sm:$0xff]
    %v453 = vld [vmem:[#allocation2 + $0xcf0] sm:$0xff]
    %v454 = vld [vmem:[#allocation2 + $0xcf8] sm:$0xff]
    %v455 = vld [vmem:[#allocation2 + $0xd00] sm:$0xff]
    %v456 = vld [vmem:[#allocation2 + $0xd08] sm:$0xff]
    %v457 = vld [vmem:[#allocation2 + $0xd10] sm:$0xff]
    %v458 = vld [vmem:[#allocation2 + $0xd18] sm:$0xff]
    %v459 = vld [vmem:[#allocation2 + $0xd20] sm:$0xff]
    %v460 = vld [vmem:[#allocation2 + $0xd28] sm:$0xff]
    %v461 = vld [vmem:[#allocation2 + $0xd30] sm:$0xff]
    %v462 = vld [vmem:[#allocation2 + $0xd38] sm:$0xff]
    %v463 = vld [vmem:[#allocation2 + $0xd40] sm:$0xff]
    %v464 = vld [vmem:[#allocation2 + $0xd48] sm:$0xff]
    %v465 = vld [vmem:[#allocation2 + $0xd50] sm:$0xff]
    %v466 = vld [vmem:[#allocation2 + $0xd58] sm:$0xff]
    %v467 = vld [vmem:[#allocation2 + $0xd60] sm:$0xff]
    %v468 = vld [vmem:[#allocation2 + $0xd68] sm:$0xff]
    %v469 = vld [vmem:[#allocation2 + $0xd70] sm:$0xff]
    %v470 = vld [vmem:[#allocation2 + $0xd78] sm:$0xff]
    %v471 = vld [vmem:[#allocation2 + $0xd80] sm:$0xff]
    %v472 = vld [vmem:[#allocation2 + $0xd88] sm:$0xff]
    %v473 = vld [vmem:[#allocation2 + $0xd90] sm:$0xff]
    %v474 = vld [vmem:[#allocation2 + $0xd98] sm:$0xff]
    %v475 = vld [vmem:[#allocation2 + $0xda0] sm:$0xff]
    %v476 = vld [vmem:[#allocation2 + $0xda8] sm:$0xff]
    %v477 = vld [vmem:[#allocation2 + $0xdb0] sm:$0xff]
    %v478 = vld [vmem:[#allocation2 + $0xdb8] sm:$0xff]
    %v479 = vld [vmem:[#allocation2 + $0xdc0] sm:$0xff]
    %v480 = vld [vmem:[#allocation2 + $0xdc8] sm:$0xff]
    %v481 = vld [vmem:[#allocation2 + $0xdd0] sm:$0xff]
    %v482 = vld [vmem:[#allocation2 + $0xdd8] sm:$0xff]
    %v483 = vld [vmem:[#allocation2 + $0xde0] sm:$0xff]
    %v484 = vld [vmem:[#allocation2 + $0xde8] sm:$0xff]
    %v485 = vld [vmem:[#allocation2 + $0xdf0] sm:$0xff]
    %v486 = vld [vmem:[#allocation2 + $0xdf8] sm:$0xff]
    %v487 = vld [vmem:[#allocation2 + $0xe00] sm:$0xff]
    %v488 = vld [vmem:[#allocation2 + $0xe08] sm:$0xff]
    %v489 = vld [vmem:[#allocation2 + $0xe10] sm:$0xff]
    %v490 = vld [vmem:[#allocation2 + $0xe18] sm:$0xff]
    %v491 = vld [vmem:[#allocation2 + $0xe20] sm:$0xff]
    %v492 = vld [vmem:[#allocation2 + $0xe28] sm:$0xff]
    %v493 = vld [vmem:[#allocation2 + $0xe30] sm:$0xff]
    %v494 = vld [vmem:[#allocation2 + $0xe38] sm:$0xff]
    %v495 = vld [vmem:[#allocation2 + $0xe40] sm:$0xff]
    %v496 = vld [vmem:[#allocation2 + $0xe48] sm:$0xff]
    %v497 = vld [vmem:[#allocation2 + $0xe50] sm:$0xff]
    %v498 = vld [vmem:[#allocation2 + $0xe58] sm:$0xff]
    %v499 = vld [vmem:[#allocation2 + $0xe60] sm:$0xff]
    %v500 = vld [vmem:[#allocation2 + $0xe68] sm:$0xff]
    %v501 = vld [vmem:[#allocation2 + $0xe70] sm:$0xff]
    %v502 = vld [vmem:[#allocation2 + $0xe78] sm:$0xff]
    %v503 = vld [vmem:[#allocation2 + $0xe80] sm:$0xff]
    %v504 = vld [vmem:[#allocation2 + $0xe88] sm:$0xff]
    %v505 = vld [vmem:[#allocation2 + $0xe90] sm:$0xff]
    %v506 = vld [vmem:[#allocation2 + $0xe98] sm:$0xff]
    %v507 = vld [vmem:[#allocation2 + $0xea0] sm:$0xff]
    %v508 = vld [vmem:[#allocation2 + $0xea8] sm:$0xff]
    %v509 = vld [vmem:[#allocation2 + $0xeb0] sm:$0xff]
    %v510 = vld [vmem:[#allocation2 + $0xeb8] sm:$0xff]
    %v511 = vld [vmem:[#allocation2 + $0xec0] sm:$0xff]
    %v512 = vld [vmem:[#allocation2 + $0xec8] sm:$0xff]
    %v513 = vld [vmem:[#allocation2 + $0xed0] sm:$0xff]
    %v514 = vld [vmem:[#allocation2 + $0xed8] sm:$0xff]
    %v515 = vld [vmem:[#allocation2 + $0xee0] sm:$0xff]
    %v516 = vld [vmem:[#allocation2 + $0xee8] sm:$0xff]
    %v517 = vld [vmem:[#allocation2 + $0xef0] sm:$0xff]
    %v518 = vld [vmem:[#allocation2 + $0xef8] sm:$0xff]
    %v520 = vlaneseq
    %v521 = vshrl.u32 %v520, 7
    %v522 = vsub.s32 0, %v521
    %v523 = vrot.slane %v38, %v522
    %v524 = vlaneseq
    %v525 = vshrl.u32 %v524, 7
    %v526 = vsub.s32 1, %v525
    %v527 = vrot.slane %v38, %v526
    %v528 = vlaneseq
    %v529 = vshrl.u32 %v528, 7
    %v530 = vsub.s32 2, %v529
    %v531 = vrot.slane %v38, %v530
    %v532 = vlaneseq
    %v533 = vshrl.u32 %v532, 7
    %v534 = vsub.s32 3, %v533
    %v535 = vrot.slane %v38, %v534
    %v536 = vlaneseq
    %v537 = vshrl.u32 %v536, 7
    %v538 = vsub.s32 4, %v537
    %v539 = vrot.slane %v38, %v538
    %545 = vmatprep.subr.mxu0 %v130
    %546 = vmatpush1.msra.mxu0 %v129
    %547 = vmatprep.subr.mxu0 %v124
    %548 = vmatpush1.msra.mxu0 %v123
    %549 = vmatprep.subr.mxu0 %v118
    %550 = vmatpush1.msra.mxu0 %v117
    %551 = vmatprep.subr.mxu0 %v112
    %552 = vmatpush1.msra.mxu0 %v111
    %553 = vmatprep.subr.mxu0 %v106
    %554 = vmatpush1.msra.mxu0 %v105
    %555 = vmatprep.subr.mxu0 %v100
    %556 = vmatpush1.msra.mxu0 %v99
    %557 = vmatprep.subr.mxu0 %v94
    %558 = vmatpush1.msra.mxu0 %v93
    %559 = vmatprep.subr.mxu0 %v88
    %560 = vmatpush1.msra.mxu0 %v87
    %561 = vmatprep.subr.mxu0 %v82
    %562 = vmatpush1.msra.mxu0 %v81
    %563 = vmatprep.subr.mxu0 %v76
    %564 = vmatpush1.msra.mxu0 %v75
    %565 = vmatprep.subr.mxu0 %v70
    %566 = vmatpush1.msra.mxu0 %v69
    %567 = vmatprep.subr.mxu0 %v64
    %568 = vmatpush1.msra.mxu0 %v63
    %569 = vmatprep.subr.mxu0 %v58
    %570 = vmatpush1.msra.mxu0 %v57
    %571 = vmatprep.subr.mxu0 %v52
    %572 = vmatpush1.msra.mxu0 %v51
    %573 = vmatprep.subr.mxu0 %v46
    %574 = vmatpush1.msra.mxu0 %v45
    %575 = vmatprep.subr.mxu0 %v40
    %576 = vmatpush1.msra.mxu0 %v39
    %577 = vmatprep.subr.mxu0 %v226
    %578 = vmatpush2.msra.mxu0 %v225
    %579 = vmatprep.subr.mxu0 %v220
    %580 = vmatpush2.msra.mxu0 %v219
    %581 = vmatprep.subr.mxu0 %v214
    %582 = vmatpush2.msra.mxu0 %v213
    %583 = vmatprep.subr.mxu0 %v208
    %584 = vmatpush2.msra.mxu0 %v207
    %585 = vmatprep.subr.mxu0 %v202
    %586 = vmatpush2.msra.mxu0 %v201
    %587 = vmatprep.subr.mxu0 %v196
    %588 = vmatpush2.msra.mxu0 %v195
    %589 = vmatprep.subr.mxu0 %v190
    %590 = vmatpush2.msra.mxu0 %v189
    %591 = vmatprep.subr.mxu0 %v184
    %592 = vmatpush2.msra.mxu0 %v183
    %593 = vmatprep.subr.mxu0 %v178
    %594 = vmatpush2.msra.mxu0 %v177
    %595 = vmatprep.subr.mxu0 %v172
    %596 = vmatpush2.msra.mxu0 %v171
    %597 = vmatprep.subr.mxu0 %v166
    %598 = vmatpush2.msra.mxu0 %v165
    %599 = vmatprep.subr.mxu0 %v160
    %600 = vmatpush2.msra.mxu0 %v159
    %601 = vmatprep.subr.mxu0 %v154
    %602 = vmatpush2.msra.mxu0 %v153
    %603 = vmatprep.subr.mxu0 %v148
    %604 = vmatpush2.msra.mxu0 %v147
    %605 = vmatprep.subr.mxu0 %v142
    %606 = vmatpush2.msra.mxu0 %v141
    %607 = vmatprep.subr.mxu0 %v136
    %608 = vmatpush2.msra.mxu0 %v135
    %609 = vmatprep.mubr.f32.mxu0 %v527
    %610 = vmatmul.mubr.f32.gmra.mxu0 %v523
    %v611 = vpop.f32.mrf.mxu0
    %v612 = vadd.f32 0.0, %v611
    %v613 = vpop.f32.mrf.mxu0
    %v614 = vadd.f32 0.0, %v613
    %615 = vdwg.mxu0
    %616 = vmatprep.subr.mxu0 %v322
    %617 = vmatpush1.msra.mxu0 %v321
    %618 = vmatprep.subr.mxu0 %v316
    %619 = vmatpush1.msra.mxu0 %v315
    %620 = vmatprep.subr.mxu0 %v310
    %621 = vmatpush1.msra.mxu0 %v309
    %622 = vmatprep.subr.mxu0 %v304
    %623 = vmatpush1.msra.mxu0 %v303
    %624 = vmatprep.subr.mxu0 %v298
    %625 = vmatpush1.msra.mxu0 %v297
    %626 = vmatprep.subr.mxu0 %v292
    %627 = vmatpush1.msra.mxu0 %v291
    %628 = vmatprep.subr.mxu0 %v286
    %629 = vmatpush1.msra.mxu0 %v285
    %630 = vmatprep.subr.mxu0 %v280
    %631 = vmatpush1.msra.mxu0 %v279
    %632 = vmatprep.subr.mxu0 %v274
    %633 = vmatpush1.msra.mxu0 %v273
    %634 = vmatprep.subr.mxu0 %v268
    %635 = vmatpush1.msra.mxu0 %v267
    %636 = vmatprep.subr.mxu0 %v262
    %637 = vmatpush1.msra.mxu0 %v261
    %638 = vmatprep.subr.mxu0 %v256
    %639 = vmatpush1.msra.mxu0 %v255
    %640 = vmatprep.subr.mxu0 %v250
    %641 = vmatpush1.msra.mxu0 %v249
    %642 = vmatprep.subr.mxu0 %v244
    %643 = vmatpush1.msra.mxu0 %v243
    %644 = vmatprep.subr.mxu0 %v238
    %645 = vmatpush1.msra.mxu0 %v237
    %646 = vmatprep.subr.mxu0 %v232
    %647 = vmatpush1.msra.mxu0 %v231
    %648 = vmatprep.subr.mxu0 %v418
    %649 = vmatpush2.msra.mxu0 %v417
    %650 = vmatprep.subr.mxu0 %v412
    %651 = vmatpush2.msra.mxu0 %v411
    %652 = vmatprep.subr.mxu0 %v406
    %653 = vmatpush2.msra.mxu0 %v405
    %654 = vmatprep.subr.mxu0 %v400
    %655 = vmatpush2.msra.mxu0 %v399
    %656 = vmatprep.subr.mxu0 %v394
    %657 = vmatpush2.msra.mxu0 %v393
    %658 = vmatprep.subr.mxu0 %v388
    %659 = vmatpush2.msra.mxu0 %v387
    %660 = vmatprep.subr.mxu0 %v382
    %661 = vmatpush2.msra.mxu0 %v381
    %662 = vmatprep.subr.mxu0 %v376
    %663 = vmatpush2.msra.mxu0 %v375
    %664 = vmatprep.subr.mxu0 %v370
    %665 = vmatpush2.msra.mxu0 %v369
    %666 = vmatprep.subr.mxu0 %v364
    %667 = vmatpush2.msra.mxu0 %v363
    %668 = vmatprep.subr.mxu0 %v358
    %669 = vmatpush2.msra.mxu0 %v357
    %670 = vmatprep.subr.mxu0 %v352
    %671 = vmatpush2.msra.mxu0 %v351
    %672 = vmatprep.subr.mxu0 %v346
    %673 = vmatpush2.msra.mxu0 %v345
    %674 = vmatprep.subr.mxu0 %v340
    %675 = vmatpush2.msra.mxu0 %v339
    %676 = vmatprep.subr.mxu0 %v334
    %677 = vmatpush2.msra.mxu0 %v333
    %678 = vmatprep.subr.mxu0 %v328
    %679 = vmatpush2.msra.mxu0 %v327
    %680 = vmatprep.mubr.f32.mxu0 %v535
    %681 = vmatmul.mubr.f32.gmra.mxu0 %v531
    %v682 = vpop.f32.mrf.mxu0
    %v683 = vadd.f32 %v612, %v682
    %v684 = vpop.f32.mrf.mxu0
    %v685 = vadd.f32 %v614, %v684
    %686 = vdwg.mxu0
    %687 = vmatprep.subr.mxu0 %v514
    %688 = vmatpush1.msra.mxu0 %v513
    %689 = vmatprep.subr.mxu0 %v508
    %690 = vmatpush1.msra.mxu0 %v507
    %691 = vmatprep.subr.mxu0 %v502
    %692 = vmatpush1.msra.mxu0 %v501
    %693 = vmatprep.subr.mxu0 %v496
    %694 = vmatpush1.msra.mxu0 %v495
    %695 = vmatprep.subr.mxu0 %v490
    %696 = vmatpush1.msra.mxu0 %v489
    %697 = vmatprep.subr.mxu0 %v484
    %698 = vmatpush1.msra.mxu0 %v483
    %699 = vmatprep.subr.mxu0 %v478
    %700 = vmatpush1.msra.mxu0 %v477
    %701 = vmatprep.subr.mxu0 %v472
    %702 = vmatpush1.msra.mxu0 %v471
    %703 = vmatprep.subr.mxu0 %v466
    %704 = vmatpush1.msra.mxu0 %v465
    %705 = vmatprep.subr.mxu0 %v460
    %706 = vmatpush1.msra.mxu0 %v459
    %707 = vmatprep.subr.mxu0 %v454
    %708 = vmatpush1.msra.mxu0 %v453
    %709 = vmatprep.subr.mxu0 %v448
    %710 = vmatpush1.msra.mxu0 %v447
    %711 = vmatprep.subr.mxu0 %v442
    %712 = vmatpush1.msra.mxu0 %v441
    %713 = vmatprep.subr.mxu0 %v436
    %714 = vmatpush1.msra.mxu0 %v435
    %715 = vmatprep.subr.mxu0 %v430
    %716 = vmatpush1.msra.mxu0 %v429
    %717 = vmatprep.subr.mxu0 %v424
    %718 = vmatpush1.msra.mxu0 %v423
    %719 = vmatprep.subr.mxu0 0.0
    %720 = vmatpush2.msra.mxu0 0.0
    %721 = vmatprep.subr.mxu0 0.0
    %722 = vmatpush2.msra.mxu0 0.0
    %723 = vmatprep.subr.mxu0 0.0
    %724 = vmatpush2.msra.mxu0 0.0
    %725 = vmatprep.subr.mxu0 0.0
    %726 = vmatpush2.msra.mxu0 0.0
    %727 = vmatprep.subr.mxu0 0.0
    %728 = vmatpush2.msra.mxu0 0.0
    %729 = vmatprep.subr.mxu0 0.0
    %730 = vmatpush2.msra.mxu0 0.0
    %731 = vmatprep.subr.mxu0 0.0
    %732 = vmatpush2.msra.mxu0 0.0
    %733 = vmatprep.subr.mxu0 0.0
    %734 = vmatpush2.msra.mxu0 0.0
    %735 = vmatprep.subr.mxu0 0.0
    %736 = vmatpush2.msra.mxu0 0.0
    %737 = vmatprep.subr.mxu0 0.0
    %738 = vmatpush2.msra.mxu0 0.0
    %739 = vmatprep.subr.mxu0 0.0
    %740 = vmatpush2.msra.mxu0 0.0
    %741 = vmatprep.subr.mxu0 0.0
    %742 = vmatpush2.msra.mxu0 0.0
    %743 = vmatprep.subr.mxu0 0.0
    %744 = vmatpush2.msra.mxu0 0.0
    %745 = vmatprep.subr.mxu0 0.0
    %746 = vmatpush2.msra.mxu0 0.0
    %747 = vmatprep.subr.mxu0 0.0
    %748 = vmatpush2.msra.mxu0 0.0
    %749 = vmatprep.subr.mxu0 0.0
    %750 = vmatpush2.msra.mxu0 0.0
    %751 = vmatprep.mubr.f32.mxu0 0.0
    %752 = vmatmul.mubr.f32.gmra.mxu0 %v539
    %v753 = vpop.f32.mrf.mxu0
    %v754 = vadd.f32 %v683, %v753
    %v755 = vpop.f32.mrf.mxu0
    %v756 = vadd.f32 %v685, %v755
    %757 = vdwg.mxu0
    %758 = vmatprep.subr.mxu0 %v132
    %759 = vmatpush1.msra.mxu0 %v131
    %760 = vmatprep.subr.mxu0 %v126
    %761 = vmatpush1.msra.mxu0 %v125
    %762 = vmatprep.subr.mxu0 %v120
    %763 = vmatpush1.msra.mxu0 %v119
    %764 = vmatprep.subr.mxu0 %v114
    %765 = vmatpush1.msra.mxu0 %v113
    %766 = vmatprep.subr.mxu0 %v108
    %767 = vmatpush1.msra.mxu0 %v107
    %768 = vmatprep.subr.mxu0 %v102
    %769 = vmatpush1.msra.mxu0 %v101
    %770 = vmatprep.subr.mxu0 %v96
    %771 = vmatpush1.msra.mxu0 %v95
    %772 = vmatprep.subr.mxu0 %v90
    %773 = vmatpush1.msra.mxu0 %v89
    %774 = vmatprep.subr.mxu0 %v84
    %775 = vmatpush1.msra.mxu0 %v83
    %776 = vmatprep.subr.mxu0 %v78
    %777 = vmatpush1.msra.mxu0 %v77
    %778 = vmatprep.subr.mxu0 %v72
    %779 = vmatpush1.msra.mxu0 %v71
    %780 = vmatprep.subr.mxu0 %v66
    %781 = vmatpush1.msra.mxu0 %v65
    %782 = vmatprep.subr.mxu0 %v60
    %783 = vmatpush1.msra.mxu0 %v59
    %784 = vmatprep.subr.mxu0 %v54
    %785 = vmatpush1.msra.mxu0 %v53
    %786 = vmatprep.subr.mxu0 %v48
    %787 = vmatpush1.msra.mxu0 %v47
    %788 = vmatprep.subr.mxu0 %v42
    %789 = vmatpush1.msra.mxu0 %v41
    %790 = vmatprep.subr.mxu0 %v228
    %791 = vmatpush2.msra.mxu0 %v227
    %792 = vmatprep.subr.mxu0 %v222
    %793 = vmatpush2.msra.mxu0 %v221
    %794 = vmatprep.subr.mxu0 %v216
    %795 = vmatpush2.msra.mxu0 %v215
    %796 = vmatprep.subr.mxu0 %v210
    %797 = vmatpush2.msra.mxu0 %v209
    %798 = vmatprep.subr.mxu0 %v204
    %799 = vmatpush2.msra.mxu0 %v203
    %800 = vmatprep.subr.mxu0 %v198
    %801 = vmatpush2.msra.mxu0 %v197
    %802 = vmatprep.subr.mxu0 %v192
    %803 = vmatpush2.msra.mxu0 %v191
    %804 = vmatprep.subr.mxu0 %v186
    %805 = vmatpush2.msra.mxu0 %v185
    %806 = vmatprep.subr.mxu0 %v180
    %807 = vmatpush2.msra.mxu0 %v179
    %808 = vmatprep.subr.mxu0 %v174
    %809 = vmatpush2.msra.mxu0 %v173
    %810 = vmatprep.subr.mxu0 %v168
    %811 = vmatpush2.msra.mxu0 %v167
    %812 = vmatprep.subr.mxu0 %v162
    %813 = vmatpush2.msra.mxu0 %v161
    %814 = vmatprep.subr.mxu0 %v156
    %815 = vmatpush2.msra.mxu0 %v155
    %816 = vmatprep.subr.mxu0 %v150
    %817 = vmatpush2.msra.mxu0 %v149
    %818 = vmatprep.subr.mxu0 %v144
    %819 = vmatpush2.msra.mxu0 %v143
    %820 = vmatprep.subr.mxu0 %v138
    %821 = vmatpush2.msra.mxu0 %v137
    %822 = vmatprep.mubr.f32.mxu0 %v527
    %823 = vmatmul.mubr.f32.gmra.mxu0 %v523
    %v824 = vpop.f32.mrf.mxu0
    %v825 = vadd.f32 0.0, %v824
    %v826 = vpop.f32.mrf.mxu0
    %v827 = vadd.f32 0.0, %v826
    %828 = vdwg.mxu0
    %829 = vmatprep.subr.mxu0 %v324
    %830 = vmatpush1.msra.mxu0 %v323
    %831 = vmatprep.subr.mxu0 %v318
    %832 = vmatpush1.msra.mxu0 %v317
    %833 = vmatprep.subr.mxu0 %v312
    %834 = vmatpush1.msra.mxu0 %v311
    %835 = vmatprep.subr.mxu0 %v306
    %836 = vmatpush1.msra.mxu0 %v305
    %837 = vmatprep.subr.mxu0 %v300
    %838 = vmatpush1.msra.mxu0 %v299
    %839 = vmatprep.subr.mxu0 %v294
    %840 = vmatpush1.msra.mxu0 %v293
    %841 = vmatprep.subr.mxu0 %v288
    %842 = vmatpush1.msra.mxu0 %v287
    %843 = vmatprep.subr.mxu0 %v282
    %844 = vmatpush1.msra.mxu0 %v281
    %845 = vmatprep.subr.mxu0 %v276
    %846 = vmatpush1.msra.mxu0 %v275
    %847 = vmatprep.subr.mxu0 %v270
    %848 = vmatpush1.msra.mxu0 %v269
    %849 = vmatprep.subr.mxu0 %v264
    %850 = vmatpush1.msra.mxu0 %v263
    %851 = vmatprep.subr.mxu0 %v258
    %852 = vmatpush1.msra.mxu0 %v257
    %853 = vmatprep.subr.mxu0 %v252
    %854 = vmatpush1.msra.mxu0 %v251
    %855 = vmatprep.subr.mxu0 %v246
    %856 = vmatpush1.msra.mxu0 %v245
    %857 = vmatprep.subr.mxu0 %v240
    %858 = vmatpush1.msra.mxu0 %v239
    %859 = vmatprep.subr.mxu0 %v234
    %860 = vmatpush1.msra.mxu0 %v233
    %861 = vmatprep.subr.mxu0 %v420
    %862 = vmatpush2.msra.mxu0 %v419
    %863 = vmatprep.subr.mxu0 %v414
    %864 = vmatpush2.msra.mxu0 %v413
    %865 = vmatprep.subr.mxu0 %v408
    %866 = vmatpush2.msra.mxu0 %v407
    %867 = vmatprep.subr.mxu0 %v402
    %868 = vmatpush2.msra.mxu0 %v401
    %869 = vmatprep.subr.mxu0 %v396
    %870 = vmatpush2.msra.mxu0 %v395
    %871 = vmatprep.subr.mxu0 %v390
    %872 = vmatpush2.msra.mxu0 %v389
    %873 = vmatprep.subr.mxu0 %v384
    %874 = vmatpush2.msra.mxu0 %v383
    %875 = vmatprep.subr.mxu0 %v378
    %876 = vmatpush2.msra.mxu0 %v377
    %877 = vmatprep.subr.mxu0 %v372
    %878 = vmatpush2.msra.mxu0 %v371
    %879 = vmatprep.subr.mxu0 %v366
    %880 = vmatpush2.msra.mxu0 %v365
    %881 = vmatprep.subr.mxu0 %v360
    %882 = vmatpush2.msra.mxu0 %v359
    %883 = vmatprep.subr.mxu0 %v354
    %884 = vmatpush2.msra.mxu0 %v353
    %885 = vmatprep.subr.mxu0 %v348
    %886 = vmatpush2.msra.mxu0 %v347
    %887 = vmatprep.subr.mxu0 %v342
    %888 = vmatpush2.msra.mxu0 %v341
    %889 = vmatprep.subr.mxu0 %v336
    %890 = vmatpush2.msra.mxu0 %v335
    %891 = vmatprep.subr.mxu0 %v330
    %892 = vmatpush2.msra.mxu0 %v329
    %893 = vmatprep.mubr.f32.mxu0 %v535
    %894 = vmatmul.mubr.f32.gmra.mxu0 %v531
    %v895 = vpop.f32.mrf.mxu0
    %v896 = vadd.f32 %v825, %v895
    %v897 = vpop.f32.mrf.mxu0
    %v898 = vadd.f32 %v827, %v897
    %899 = vdwg.mxu0
    %900 = vmatprep.subr.mxu0 %v516
    %901 = vmatpush1.msra.mxu0 %v515
    %902 = vmatprep.subr.mxu0 %v510
    %903 = vmatpush1.msra.mxu0 %v509
    %904 = vmatprep.subr.mxu0 %v504
    %905 = vmatpush1.msra.mxu0 %v503
    %906 = vmatprep.subr.mxu0 %v498
    %907 = vmatpush1.msra.mxu0 %v497
    %908 = vmatprep.subr.mxu0 %v492
    %909 = vmatpush1.msra.mxu0 %v491
    %910 = vmatprep.subr.mxu0 %v486
    %911 = vmatpush1.msra.mxu0 %v485
    %912 = vmatprep.subr.mxu0 %v480
    %913 = vmatpush1.msra.mxu0 %v479
    %914 = vmatprep.subr.mxu0 %v474
    %915 = vmatpush1.msra.mxu0 %v473
    %916 = vmatprep.subr.mxu0 %v468
    %917 = vmatpush1.msra.mxu0 %v467
    %918 = vmatprep.subr.mxu0 %v462
    %919 = vmatpush1.msra.mxu0 %v461
    %920 = vmatprep.subr.mxu0 %v456
    %921 = vmatpush1.msra.mxu0 %v455
    %922 = vmatprep.subr.mxu0 %v450
    %923 = vmatpush1.msra.mxu0 %v449
    %924 = vmatprep.subr.mxu0 %v444
    %925 = vmatpush1.msra.mxu0 %v443
    %926 = vmatprep.subr.mxu0 %v438
    %927 = vmatpush1.msra.mxu0 %v437
    %928 = vmatprep.subr.mxu0 %v432
    %929 = vmatpush1.msra.mxu0 %v431
    %930 = vmatprep.subr.mxu0 %v426
    %931 = vmatpush1.msra.mxu0 %v425
    %932 = vmatprep.subr.mxu0 0.0
    %933 = vmatpush2.msra.mxu0 0.0
    %934 = vmatprep.subr.mxu0 0.0
    %935 = vmatpush2.msra.mxu0 0.0
    %936 = vmatprep.subr.mxu0 0.0
    %937 = vmatpush2.msra.mxu0 0.0
    %938 = vmatprep.subr.mxu0 0.0
    %939 = vmatpush2.msra.mxu0 0.0
    %940 = vmatprep.subr.mxu0 0.0
    %941 = vmatpush2.msra.mxu0 0.0
    %942 = vmatprep.subr.mxu0 0.0
    %943 = vmatpush2.msra.mxu0 0.0
    %944 = vmatprep.subr.mxu0 0.0
    %945 = vmatpush2.msra.mxu0 0.0
    %946 = vmatprep.subr.mxu0 0.0
    %947 = vmatpush2.msra.mxu0 0.0
    %948 = vmatprep.subr.mxu0 0.0
    %949 = vmatpush2.msra.mxu0 0.0
    %950 = vmatprep.subr.mxu0 0.0
    %951 = vmatpush2.msra.mxu0 0.0
    %952 = vmatprep.subr.mxu0 0.0
    %953 = vmatpush2.msra.mxu0 0.0
    %954 = vmatprep.subr.mxu0 0.0
    %955 = vmatpush2.msra.mxu0 0.0
    %956 = vmatprep.subr.mxu0 0.0
    %957 = vmatpush2.msra.mxu0 0.0
    %958 = vmatprep.subr.mxu0 0.0
    %959 = vmatpush2.msra.mxu0 0.0
    %960 = vmatprep.subr.mxu0 0.0
    %961 = vmatpush2.msra.mxu0 0.0
    %962 = vmatprep.subr.mxu0 0.0
    %963 = vmatpush2.msra.mxu0 0.0
    %964 = vmatprep.mubr.f32.mxu0 0.0
    %965 = vmatmul.mubr.f32.gmra.mxu0 %v539
    %v966 = vpop.f32.mrf.mxu0
    %v967 = vadd.f32 %v896, %v966
    %v968 = vpop.f32.mrf.mxu0
    %v969 = vadd.f32 %v898, %v968
    %970 = vdwg.mxu0
    %971 = vmatprep.subr.mxu0 %v134
    %972 = vmatpush1.msra.mxu0 %v133
    %973 = vmatprep.subr.mxu0 %v128
    %974 = vmatpush1.msra.mxu0 %v127
    %975 = vmatprep.subr.mxu0 %v122
    %976 = vmatpush1.msra.mxu0 %v121
    %977 = vmatprep.subr.mxu0 %v116
    %978 = vmatpush1.msra.mxu0 %v115
    %979 = vmatprep.subr.mxu0 %v110
    %980 = vmatpush1.msra.mxu0 %v109
    %981 = vmatprep.subr.mxu0 %v104
    %982 = vmatpush1.msra.mxu0 %v103
    %983 = vmatprep.subr.mxu0 %v98
    %984 = vmatpush1.msra.mxu0 %v97
    %985 = vmatprep.subr.mxu0 %v92
    %986 = vmatpush1.msra.mxu0 %v91
    %987 = vmatprep.subr.mxu0 %v86
    %988 = vmatpush1.msra.mxu0 %v85
    %989 = vmatprep.subr.mxu0 %v80
    %990 = vmatpush1.msra.mxu0 %v79
    %991 = vmatprep.subr.mxu0 %v74
    %992 = vmatpush1.msra.mxu0 %v73
    %993 = vmatprep.subr.mxu0 %v68
    %994 = vmatpush1.msra.mxu0 %v67
    %995 = vmatprep.subr.mxu0 %v62
    %996 = vmatpush1.msra.mxu0 %v61
    %997 = vmatprep.subr.mxu0 %v56
    %998 = vmatpush1.msra.mxu0 %v55
    %999 = vmatprep.subr.mxu0 %v50
    %1000 = vmatpush1.msra.mxu0 %v49
    %1001 = vmatprep.subr.mxu0 %v44
    %1002 = vmatpush1.msra.mxu0 %v43
    %1003 = vmatprep.subr.mxu0 %v230
    %1004 = vmatpush2.msra.mxu0 %v229
    %1005 = vmatprep.subr.mxu0 %v224
    %1006 = vmatpush2.msra.mxu0 %v223
    %1007 = vmatprep.subr.mxu0 %v218
    %1008 = vmatpush2.msra.mxu0 %v217
    %1009 = vmatprep.subr.mxu0 %v212
    %1010 = vmatpush2.msra.mxu0 %v211
    %1011 = vmatprep.subr.mxu0 %v206
    %1012 = vmatpush2.msra.mxu0 %v205
    %1013 = vmatprep.subr.mxu0 %v200
    %1014 = vmatpush2.msra.mxu0 %v199
    %1015 = vmatprep.subr.mxu0 %v194
    %1016 = vmatpush2.msra.mxu0 %v193
    %1017 = vmatprep.subr.mxu0 %v188
    %1018 = vmatpush2.msra.mxu0 %v187
    %1019 = vmatprep.subr.mxu0 %v182
    %1020 = vmatpush2.msra.mxu0 %v181
    %1021 = vmatprep.subr.mxu0 %v176
    %1022 = vmatpush2.msra.mxu0 %v175
    %1023 = vmatprep.subr.mxu0 %v170
    %1024 = vmatpush2.msra.mxu0 %v169
    %1025 = vmatprep.subr.mxu0 %v164
    %1026 = vmatpush2.msra.mxu0 %v163
    %1027 = vmatprep.subr.mxu0 %v158
    %1028 = vmatpush2.msra.mxu0 %v157
    %1029 = vmatprep.subr.mxu0 %v152
    %1030 = vmatpush2.msra.mxu0 %v151
    %1031 = vmatprep.subr.mxu0 %v146
    %1032 = vmatpush2.msra.mxu0 %v145
    %1033 = vmatprep.subr.mxu0 %v140
    %1034 = vmatpush2.msra.mxu0 %v139
    %1035 = vmatprep.mubr.f32.mxu0 %v527
    %1036 = vmatmul.mubr.f32.gmra.mxu0 %v523
    %v1037 = vpop.f32.mrf.mxu0
    %v1038 = vadd.f32 0.0, %v1037
    %v1039 = vpop.f32.mrf.mxu0
    %v1040 = vadd.f32 0.0, %v1039
    %1041 = vdwg.mxu0
    %1042 = vmatprep.subr.mxu0 %v326
    %1043 = vmatpush1.msra.mxu0 %v325
    %1044 = vmatprep.subr.mxu0 %v320
    %1045 = vmatpush1.msra.mxu0 %v319
    %1046 = vmatprep.subr.mxu0 %v314
    %1047 = vmatpush1.msra.mxu0 %v313
    %1048 = vmatprep.subr.mxu0 %v308
    %1049 = vmatpush1.msra.mxu0 %v307
    %1050 = vmatprep.subr.mxu0 %v302
    %1051 = vmatpush1.msra.mxu0 %v301
    %1052 = vmatprep.subr.mxu0 %v296
    %1053 = vmatpush1.msra.mxu0 %v295
    %1054 = vmatprep.subr.mxu0 %v290
    %1055 = vmatpush1.msra.mxu0 %v289
    %1056 = vmatprep.subr.mxu0 %v284
    %1057 = vmatpush1.msra.mxu0 %v283
    %1058 = vmatprep.subr.mxu0 %v278
    %1059 = vmatpush1.msra.mxu0 %v277
    %1060 = vmatprep.subr.mxu0 %v272
    %1061 = vmatpush1.msra.mxu0 %v271
    %1062 = vmatprep.subr.mxu0 %v266
    %1063 = vmatpush1.msra.mxu0 %v265
    %1064 = vmatprep.subr.mxu0 %v260
    %1065 = vmatpush1.msra.mxu0 %v259
    %1066 = vmatprep.subr.mxu0 %v254
    %1067 = vmatpush1.msra.mxu0 %v253
    %1068 = vmatprep.subr.mxu0 %v248
    %1069 = vmatpush1.msra.mxu0 %v247
    %1070 = vmatprep.subr.mxu0 %v242
    %1071 = vmatpush1.msra.mxu0 %v241
    %1072 = vmatprep.subr.mxu0 %v236
    %1073 = vmatpush1.msra.mxu0 %v235
    %1074 = vmatprep.subr.mxu0 %v422
    %1075 = vmatpush2.msra.mxu0 %v421
    %1076 = vmatprep.subr.mxu0 %v416
    %1077 = vmatpush2.msra.mxu0 %v415
    %1078 = vmatprep.subr.mxu0 %v410
    %1079 = vmatpush2.msra.mxu0 %v409
    %1080 = vmatprep.subr.mxu0 %v404
    %1081 = vmatpush2.msra.mxu0 %v403
    %1082 = vmatprep.subr.mxu0 %v398
    %1083 = vmatpush2.msra.mxu0 %v397
    %1084 = vmatprep.subr.mxu0 %v392
    %1085 = vmatpush2.msra.mxu0 %v391
    %1086 = vmatprep.subr.mxu0 %v386
    %1087 = vmatpush2.msra.mxu0 %v385
    %1088 = vmatprep.subr.mxu0 %v380
    %1089 = vmatpush2.msra.mxu0 %v379
    %1090 = vmatprep.subr.mxu0 %v374
    %1091 = vmatpush2.msra.mxu0 %v373
    %1092 = vmatprep.subr.mxu0 %v368
    %1093 = vmatpush2.msra.mxu0 %v367
    %1094 = vmatprep.subr.mxu0 %v362
    %1095 = vmatpush2.msra.mxu0 %v361
    %1096 = vmatprep.subr.mxu0 %v356
    %1097 = vmatpush2.msra.mxu0 %v355
    %1098 = vmatprep.subr.mxu0 %v350
    %1099 = vmatpush2.msra.mxu0 %v349
    %1100 = vmatprep.subr.mxu0 %v344
    %1101 = vmatpush2.msra.mxu0 %v343
    %1102 = vmatprep.subr.mxu0 %v338
    %1103 = vmatpush2.msra.mxu0 %v337
    %1104 = vmatprep.subr.mxu0 %v332
    %1105 = vmatpush2.msra.mxu0 %v331
    %1106 = vmatprep.mubr.f32.mxu0 %v535
    %1107 = vmatmul.mubr.f32.gmra.mxu0 %v531
    %v1108 = vpop.f32.mrf.mxu0
    %v1109 = vadd.f32 %v1038, %v1108
    %v1110 = vpop.f32.mrf.mxu0
    %v1111 = vadd.f32 %v1040, %v1110
    %1112 = vdwg.mxu0
    %1113 = vmatprep.subr.mxu0 %v518
    %1114 = vmatpush1.msra.mxu0 %v517
    %1115 = vmatprep.subr.mxu0 %v512
    %1116 = vmatpush1.msra.mxu0 %v511
    %1117 = vmatprep.subr.mxu0 %v506
    %1118 = vmatpush1.msra.mxu0 %v505
    %1119 = vmatprep.subr.mxu0 %v500
    %1120 = vmatpush1.msra.mxu0 %v499
    %1121 = vmatprep.subr.mxu0 %v494
    %1122 = vmatpush1.msra.mxu0 %v493
    %1123 = vmatprep.subr.mxu0 %v488
    %1124 = vmatpush1.msra.mxu0 %v487
    %1125 = vmatprep.subr.mxu0 %v482
    %1126 = vmatpush1.msra.mxu0 %v481
    %1127 = vmatprep.subr.mxu0 %v476
    %1128 = vmatpush1.msra.mxu0 %v475
    %1129 = vmatprep.subr.mxu0 %v470
    %1130 = vmatpush1.msra.mxu0 %v469
    %1131 = vmatprep.subr.mxu0 %v464
    %1132 = vmatpush1.msra.mxu0 %v463
    %1133 = vmatprep.subr.mxu0 %v458
    %1134 = vmatpush1.msra.mxu0 %v457
    %1135 = vmatprep.subr.mxu0 %v452
    %1136 = vmatpush1.msra.mxu0 %v451
    %1137 = vmatprep.subr.mxu0 %v446
    %1138 = vmatpush1.msra.mxu0 %v445
    %1139 = vmatprep.subr.mxu0 %v440
    %1140 = vmatpush1.msra.mxu0 %v439
    %1141 = vmatprep.subr.mxu0 %v434
    %1142 = vmatpush1.msra.mxu0 %v433
    %1143 = vmatprep.subr.mxu0 %v428
    %1144 = vmatpush1.msra.mxu0 %v427
    %1145 = vmatprep.subr.mxu0 0.0
    %1146 = vmatpush2.msra.mxu0 0.0
    %1147 = vmatprep.subr.mxu0 0.0
    %1148 = vmatpush2.msra.mxu0 0.0
    %1149 = vmatprep.subr.mxu0 0.0
    %1150 = vmatpush2.msra.mxu0 0.0
    %1151 = vmatprep.subr.mxu0 0.0
    %1152 = vmatpush2.msra.mxu0 0.0
    %1153 = vmatprep.subr.mxu0 0.0
    %1154 = vmatpush2.msra.mxu0 0.0
    %1155 = vmatprep.subr.mxu0 0.0
    %1156 = vmatpush2.msra.mxu0 0.0
    %1157 = vmatprep.subr.mxu0 0.0
    %1158 = vmatpush2.msra.mxu0 0.0
    %1159 = vmatprep.subr.mxu0 0.0
    %1160 = vmatpush2.msra.mxu0 0.0
    %1161 = vmatprep.subr.mxu0 0.0
    %1162 = vmatpush2.msra.mxu0 0.0
    %1163 = vmatprep.subr.mxu0 0.0
    %1164 = vmatpush2.msra.mxu0 0.0
    %1165 = vmatprep.subr.mxu0 0.0
    %1166 = vmatpush2.msra.mxu0 0.0
    %1167 = vmatprep.subr.mxu0 0.0
    %1168 = vmatpush2.msra.mxu0 0.0
    %1169 = vmatprep.subr.mxu0 0.0
    %1170 = vmatpush2.msra.mxu0 0.0
    %1171 = vmatprep.subr.mxu0 0.0
    %1172 = vmatpush2.msra.mxu0 0.0
    %1173 = vmatprep.subr.mxu0 0.0
    %1174 = vmatpush2.msra.mxu0 0.0
    %1175 = vmatprep.subr.mxu0 0.0
    %1176 = vmatpush2.msra.mxu0 0.0
    %1177 = vmatprep.mubr.f32.mxu0 0.0
    %1178 = vmatmul.mubr.f32.gmra.mxu0 %v539
    %v1179 = vpop.f32.mrf.mxu0
    %v1180 = vadd.f32 %v1109, %v1179
    %v1181 = vpop.f32.mrf.mxu0
    %v1182 = vadd.f32 %v1111, %v1181
    %1183 = vdwg.mxu0
    %v1190 = vcombine.low %v754, %v756
    %v1191 = vcombine.low %v967, %v969
    %v1192 = vcombine.low %v1180, %v1182
    %v1194 = vunpack.c.l.s4 1966171168
    %v1195 = vunpack.c.0.s8 %v1194
    %v1196 = vlaneseq
    %v1197 = vshrl.u32 %v1196, 7
    %v1198 = vsub.s32 %v1195, %v1197
    %v1199 = vrot.slane %v1190, %v1198
    %v1201 = vunpack.c.l.s4 1966171168
    %v1202 = vunpack.c.0.s8 %v1201
    %v1203 = vlaneseq
    %v1204 = vshrl.u32 %v1203, 7
    %v1205 = vsub.s32 %v1202, %v1204
    %v1206 = vrot.slane %v1191, %v1205
    %v1208 = vunpack.c.l.s4 1966171168
    %v1209 = vunpack.c.0.s8 %v1208
    %v1210 = vlaneseq
    %v1211 = vshrl.u32 %v1210, 7
    %v1212 = vsub.s32 %v1209, %v1211
    %v1213 = vrot.slane %v1192, %v1212
    %v1214 = vcombine.low %v1199, %v1206
    %v1216 = vunpack.c.l.s4 1966171168
    %v1217 = vunpack.c.0.s8 %v1216
    %v1218 = vlaneseq
    %v1219 = vshrl.u32 %v1218, 7
    %v1220 = vsub.s32 %v1217, %v1219
    %v1221 = vrot.slane %v1214, %v1220
    %v1223 = vunpack.c.l.s4 1966171168
    %v1224 = vunpack.c.0.s8 %v1223
    %v1225 = vlaneseq
    %v1226 = vshrl.u32 %v1225, 7
    %v1227 = vsub.s32 %v1224, %v1226
    %v1228 = vrot.slane %v1213, %v1227
    %v1229 = vcombine.low %v1221, %v1228
    %v1231 = vlaneseq
    %vm1232 = vcmp.ge.s32.totalorder %v1231, 0
    %vm1233 = vcmp.lt.s32.totalorder %v1231, 768
    %vm1234 = vmand %vm1232, %vm1233
    %1235 = vst.msk [vmem:[#allocation7] sm:$0x3f] %vm1234, %v1229
    // Predicated region
    $region18: #{tpu_custom_call.1} parent=1 // pred_check
      _
    $region19: #{tpu_custom_call.1} parent=1 // pred_check_branch
      %1237 = sbr.rel (0) target = $region21
    $region20: #{tpu_custom_call.1} parent=1 // pred_region
      %s1239 = ssub.s32 96, 96
      %1240 = vsyncadd [#allocation4], %s1239
      %s1242 = sshll.u32 [#allocation7], 4
      %s1243 = int_to_ptr.vmem [resolvable:$true] %s1242
      %1245 = dma.vmem_to_hbm [thread:$0]  %s1243, 96, %s2, [#allocation4]
    $region21: #{tpu_custom_call.1} parent=1 // pred_fallthru
      _
    // Predicated region
    $region22: #{tpu_custom_call.1} parent=1 // pred_check
      _
    $region23: #{tpu_custom_call.1} parent=1 // pred_check_branch
      %1247 = sbr.rel (0) target = $region25
    $region24: #{tpu_custom_call.1} parent=1 // pred_region
      %1248 = dma.done [#allocation4], 96
    $region25: #{tpu_custom_call.1} parent=1 // pred_fallthru
      _
    %1249 = vsyncpa [#allocation3], 1
    %1250 = vsyncpa [#allocation6], 1
    %1251 = vsyncpa [#allocation4], 1

</llo_original>
